<compile_context>
chip_gen: v7x
topology: tpu7x:2x2x1
jax: 0.10.0
libtpu: 0.0.40
codegen_flags: <defaults>
</compile_context>

<pallas_src>
import math

import jax
import jax.numpy as jnp
from jax.experimental import pallas as pl
from jax.experimental.pallas import tpu as pltpu

# ---------------- static configuration ----------------
INPUT_DIM = 16
HIDDEN_DIM = 32
NUM_HIDDEN_LAYERS = 2
OUTPUT_DIM = 8
L_FSQ = 5           # > 1 -> FSQ layer inserted at index num_hidden_layers//2 + 1
FSQ_EPS = 1e-3
BATCH = 256         # demo batch (small); wrapper handles any B that tiles cleanly
DEFAULT_TILE_B = 512  # rows per grid step; min(B, 512) -> single step for small batches


# ---------------- math helpers ----------------
def _mish_fast(x):
    # Mish(x) = x * tanh(softplus(x)) = x * (s - 1) / (s + 1),  s = (1 + e^x)^2.
    # 1 EUP exp + 1 reciprocal instead of exp + log1p + tanh (3 EUP ops).
    # Clamping the exp argument at 20 is lossless in f32 (the ratio already rounds
    # to 1.0 there) and avoids inf/inf for very large inputs.
    t = jnp.exp(jnp.minimum(x, 20.0))
    s = (1.0 + t) * (1.0 + t)
    return x * (s - 1.0) / (s + 1.0)


def _softplus_stable(x):
    return jnp.maximum(x, 0.0) + jnp.log1p(jnp.exp(-jnp.abs(x)))


def _mish_ref(x):
    # Reference Mish, written exactly as torch.nn.Mish (numerically stable form).
    return x * jnp.tanh(_softplus_stable(x))


def _fsq_quantize(z, levels: int, eps: float):
    """FSQ with identical levels per dimension (scalar constants folded at trace time)."""
    half_l = (levels - 1) * (1.0 - eps) / 2.0
    offset = 0.0 if (levels % 2 == 1) else 0.5
    # NOTE: the torch module uses tan(offset/half_l); for odd level counts offset==0 so
    # shift==0 and this matches exactly (for even counts the torch code itself diverges
    # from reference FSQ implementations that use atan -- we stay faithful to the module).
    shift = math.tan(offset / half_l)
    bounded = jnp.tanh(z + shift) * half_l - offset
    quantized = jnp.round(bounded)            # forward pass of round_ste
    half_width = float(levels // 2)
    return quantized * (1.0 / half_width)


# ---------------- Pallas kernel: full MLP hot path (batch on lanes) ----------------
def mlp_fsq_kernel(xt_ref, w0_ref, b0_ref, w1_ref, b1_ref, w2_ref, b2_ref, ot_ref):
    # All operands are (features, batch_tile): batch rides the 128-lane axis.
    # layer 0: Linear(input, hidden) + Mish
    h = jnp.dot(w0_ref[...], xt_ref[...], preferred_element_type=jnp.float32) + b0_ref[...]
    h = _mish_fast(h)
    # layer 1: Linear(hidden, hidden) + Mish
    h = jnp.dot(w1_ref[...], h, preferred_element_type=jnp.float32) + b1_ref[...]
    h = _mish_fast(h)
    # layer 2: FSQ quantizer (the torch forward `continue`s past the activation here)
    h = _fsq_quantize(h, L_FSQ, FSQ_EPS)
    # layer 3: Linear(hidden, output_dim), no activation (last layer); lane-dense store
    ot_ref[...] = (jnp.dot(w2_ref[...], h, preferred_element_type=jnp.float32)
                   + b2_ref[...]).astype(ot_ref.dtype)


def mlp_forward(x, params, *, tile_b=DEFAULT_TILE_B):
    """x: (B, input_dim) row-major, as in the torch module. Returns (B, output_dim) f32."""
    w0, b0, w1, b1, w2, b2 = params   # weights (out, in), biases (out, 1)
    B = x.shape[0]
    tb = min(tile_b, B)
    assert B % tb == 0, "batch must be a multiple of the batch tile"
    assert tb == B or tb % 128 == 0, "batch tile must be lane-aligned (x128) or the full batch"

    xt = x.T  # (input_dim, B): batch on the lane axis (wrapper-side layout plumbing)
    const = lambda i: (0, 0)  # weights/biases: same whole block every step -> VMEM resident

    out_t = pl.pallas_call(
        mlp_fsq_kernel,
        out_shape=jax.ShapeDtypeStruct((OUTPUT_DIM, B), jnp.float32),
        grid_spec=pltpu.PrefetchScalarGridSpec(
            num_scalar_prefetch=0,
            grid=(B // tb,),
            in_specs=[
                pl.BlockSpec((INPUT_DIM, tb), lambda i: (0, i)),        # x^T tile (streams)
                pl.BlockSpec((HIDDEN_DIM, INPUT_DIM), const),           # W0
                pl.BlockSpec((HIDDEN_DIM, 1), const),                   # b0
                pl.BlockSpec((HIDDEN_DIM, HIDDEN_DIM), const),          # W1
                pl.BlockSpec((HIDDEN_DIM, 1), const),                   # b1
                pl.BlockSpec((OUTPUT_DIM, HIDDEN_DIM), const),          # W2
                pl.BlockSpec((OUTPUT_DIM, 1), const),                   # b2
            ],
            out_specs=pl.BlockSpec((OUTPUT_DIM, tb), lambda i: (0, i)),  # lane-dense output
        ),
        compiler_params=pltpu.CompilerParams(dimension_semantics=("parallel",)),
    )(xt, w0, b0, w1, b1, w2, b2)
    return out_t.T  # back to (B, output_dim)


# ---------------- deterministic parameter construction (nn.Linear-style init) ----------------
def init_linear(key, fan_in, fan_out):
    kw, kb = jax.random.split(key)
    bound = 1.0 / math.sqrt(fan_in)
    w = jax.random.uniform(kw, (fan_out, fan_in), jnp.float32, -bound, bound)  # torch (out, in)
    b = jax.random.uniform(kb, (fan_out, 1), jnp.float32, -bound, bound)       # (out, 1)
    return w, b


def init_params(key):
    k0, k1, k2 = jax.random.split(key, 3)
    w0, b0 = init_linear(k0, INPUT_DIM, HIDDEN_DIM)
    w1, b1 = init_linear(k1, HIDDEN_DIM, HIDDEN_DIM)
    w2, b2 = init_linear(k2, HIDDEN_DIM, OUTPUT_DIM)
    return w0, b0, w1, b1, w2, b2


# ---------------- pure-JAX reference (faithful to the torch forward) ----------------
def mlp_reference(x, params):
    w0, b0, w1, b1, w2, b2 = params
    h = _mish_ref(x @ w0.T + b0[:, 0])
    h = _mish_ref(h @ w1.T + b1[:, 0])
    h = _fsq_quantize(h, L_FSQ, FSQ_EPS)
    return h @ w2.T + b2[:, 0]


if __name__ == "__main__":
    key = jax.random.PRNGKey(0)
    kx, kp = jax.random.split(key)
    x = jax.random.normal(kx, (BATCH, INPUT_DIM), jnp.float32)
    params = init_params(kp)

    out = jax.block_until_ready(mlp_forward(x, params))   # B=256 -> one 256-row step
    ref = mlp_reference(x, params)

    assert out.shape == (BATCH, OUTPUT_DIM)
    assert bool(jnp.all(jnp.isfinite(out)))

    # Strict elementwise check, but tolerant of rare FSQ boundary flips: a ~1e-6 fp
    # difference between the in-kernel MXU matmul and the XLA reference matmul can
    # flip jnp.round for a hidden code sitting exactly on a quantization boundary,
    # perturbing one output row by at most 0.5 * max|W2| (~0.09).
    err = jnp.abs(out - ref)
    n_bad = int(jnp.sum(err > 1e-3))
    assert n_bad <= 4 * OUTPUT_DIM, (n_bad, float(jnp.max(err)))
    assert float(jnp.max(err)) < 0.2, float(jnp.max(err))
    assert float(jnp.mean(err)) < 1e-3, float(jnp.mean(err))

    print("KERNEL_OK")
</pallas_src>

<mosaic_0001>
module attributes {stable_mosaic.version = 11 : i64} {
  func.func @mlp_fsq_kernel(%arg0: i32, %arg1: memref<16x256xf32, #tpu.memory_space<vmem>>, %arg2: memref<32x16xf32, #tpu.memory_space<vmem>>, %arg3: memref<32x1xf32, #tpu.memory_space<vmem>>, %arg4: memref<32x32xf32, #tpu.memory_space<vmem>>, %arg5: memref<32x1xf32, #tpu.memory_space<vmem>>, %arg6: memref<8x32xf32, #tpu.memory_space<vmem>>, %arg7: memref<8x1xf32, #tpu.memory_space<vmem>>, %arg8: memref<8x256xf32, #tpu.memory_space<vmem>>) attributes {dimension_semantics = [#tpu.dimension_semantics<parallel>], iteration_bounds = array<i64: 1>, scalar_prefetch = 0 : i64, scratch_operands = 0 : i64, tpu.core_type = #tpu.core_type<tc>, window_params = [{transform_indices = @transform_0, window_bounds = array<i64: 16, 256>}, {pipeline_mode = #tpu.pipeline_mode<synchronous>, transform_indices = @transform_1, window_bounds = array<i64: 32, 16>}, {pipeline_mode = #tpu.pipeline_mode<synchronous>, transform_indices = @transform_2, window_bounds = array<i64: 32, 1>}, {pipeline_mode = #tpu.pipeline_mode<synchronous>, transform_indices = @transform_3, window_bounds = array<i64: 32, 32>}, {pipeline_mode = #tpu.pipeline_mode<synchronous>, transform_indices = @transform_4, window_bounds = array<i64: 32, 1>}, {pipeline_mode = #tpu.pipeline_mode<synchronous>, transform_indices = @transform_5, window_bounds = array<i64: 8, 32>}, {pipeline_mode = #tpu.pipeline_mode<synchronous>, transform_indices = @transform_6, window_bounds = array<i64: 8, 1>}, {transform_indices = @transform_7, window_bounds = array<i64: 8, 256>}]} {
    %c0 = arith.constant 0 : index
    %c0_0 = arith.constant 0 : index
    %0 = vector.load %arg2[%c0, %c0_0] : memref<32x16xf32, #tpu.memory_space<vmem>>, vector<32x16xf32>
    %c0_1 = arith.constant 0 : index
    %c0_2 = arith.constant 0 : index
    %1 = vector.load %arg1[%c0_1, %c0_2] : memref<16x256xf32, #tpu.memory_space<vmem>>, vector<16x256xf32>
    %cst = arith.constant dense<0.000000e+00> : vector<32x256xf32>
    %2 = tpu.matmul %0, %1, %cst {dimension_numbers = #tpu.dot_dimension_numbers<[1], [0], [0], [1], [0, 0, 1, 1], [], []>} : vector<32x16xf32>, vector<16x256xf32>, vector<32x256xf32> -> vector<32x256xf32>
    %c0_3 = arith.constant 0 : index
    %c0_4 = arith.constant 0 : index
    %3 = vector.load %arg3[%c0_3, %c0_4] : memref<32x1xf32, #tpu.memory_space<vmem>>, vector<32x1xf32>
    %4 = vector.broadcast %3 : vector<32x1xf32> to vector<32x256xf32>
    %5 = arith.addf %2, %4 : vector<32x256xf32>
    %cst_5 = arith.constant 2.000000e+01 : f32
    %6 = vector.broadcast %cst_5 : f32 to vector<32x256xf32>
    %7 = arith.minimumf %5, %6 : vector<32x256xf32>
    %8 = math.exp %7 : vector<32x256xf32>
    %cst_6 = arith.constant 1.000000e+00 : f32
    %9 = vector.broadcast %cst_6 : f32 to vector<32x256xf32>
    %10 = arith.addf %9, %8 : vector<32x256xf32>
    %cst_7 = arith.constant 1.000000e+00 : f32
    %11 = vector.broadcast %cst_7 : f32 to vector<32x256xf32>
    %12 = arith.addf %11, %8 : vector<32x256xf32>
    %13 = arith.mulf %10, %12 : vector<32x256xf32>
    %cst_8 = arith.constant 1.000000e+00 : f32
    %14 = vector.broadcast %cst_8 : f32 to vector<32x256xf32>
    %15 = arith.subf %13, %14 : vector<32x256xf32>
    %16 = arith.mulf %5, %15 : vector<32x256xf32>
    %cst_9 = arith.constant 1.000000e+00 : f32
    %17 = vector.broadcast %cst_9 : f32 to vector<32x256xf32>
    %18 = arith.addf %13, %17 : vector<32x256xf32>
    %19 = arith.divf %16, %18 : vector<32x256xf32>
    %c0_10 = arith.constant 0 : index
    %c0_11 = arith.constant 0 : index
    %20 = vector.load %arg4[%c0_10, %c0_11] : memref<32x32xf32, #tpu.memory_space<vmem>>, vector<32x32xf32>
    %cst_12 = arith.constant dense<0.000000e+00> : vector<32x256xf32>
    %21 = tpu.matmul %20, %19, %cst_12 {dimension_numbers = #tpu.dot_dimension_numbers<[1], [0], [0], [1], [0, 0, 1, 1], [], []>} : vector<32x32xf32>, vector<32x256xf32>, vector<32x256xf32> -> vector<32x256xf32>
    %c0_13 = arith.constant 0 : index
    %c0_14 = arith.constant 0 : index
    %22 = vector.load %arg5[%c0_13, %c0_14] : memref<32x1xf32, #tpu.memory_space<vmem>>, vector<32x1xf32>
    %23 = vector.broadcast %22 : vector<32x1xf32> to vector<32x256xf32>
    %24 = arith.addf %21, %23 : vector<32x256xf32>
    %cst_15 = arith.constant 2.000000e+01 : f32
    %25 = vector.broadcast %cst_15 : f32 to vector<32x256xf32>
    %26 = arith.minimumf %24, %25 : vector<32x256xf32>
    %27 = math.exp %26 : vector<32x256xf32>
    %cst_16 = arith.constant 1.000000e+00 : f32
    %28 = vector.broadcast %cst_16 : f32 to vector<32x256xf32>
    %29 = arith.addf %28, %27 : vector<32x256xf32>
    %cst_17 = arith.constant 1.000000e+00 : f32
    %30 = vector.broadcast %cst_17 : f32 to vector<32x256xf32>
    %31 = arith.addf %30, %27 : vector<32x256xf32>
    %32 = arith.mulf %29, %31 : vector<32x256xf32>
    %cst_18 = arith.constant 1.000000e+00 : f32
    %33 = vector.broadcast %cst_18 : f32 to vector<32x256xf32>
    %34 = arith.subf %32, %33 : vector<32x256xf32>
    %35 = arith.mulf %24, %34 : vector<32x256xf32>
    %cst_19 = arith.constant 1.000000e+00 : f32
    %36 = vector.broadcast %cst_19 : f32 to vector<32x256xf32>
    %37 = arith.addf %32, %36 : vector<32x256xf32>
    %38 = arith.divf %35, %37 : vector<32x256xf32>
    %cst_20 = arith.constant 0.000000e+00 : f32
    %39 = vector.broadcast %cst_20 : f32 to vector<32x256xf32>
    %40 = arith.addf %38, %39 : vector<32x256xf32>
    %41 = math.tanh %40 : vector<32x256xf32>
    %cst_21 = arith.constant 1.998000e+00 : f32
    %42 = vector.broadcast %cst_21 : f32 to vector<32x256xf32>
    %43 = arith.mulf %41, %42 : vector<32x256xf32>
    %cst_22 = arith.constant 0.000000e+00 : f32
    %44 = vector.broadcast %cst_22 : f32 to vector<32x256xf32>
    %45 = arith.subf %43, %44 : vector<32x256xf32>
    %46 = math.roundeven %45 : vector<32x256xf32>
    %cst_23 = arith.constant 5.000000e-01 : f32
    %47 = vector.broadcast %cst_23 : f32 to vector<32x256xf32>
    %48 = arith.mulf %46, %47 : vector<32x256xf32>
    %c0_24 = arith.constant 0 : index
    %c0_25 = arith.constant 0 : index
    %49 = vector.load %arg6[%c0_24, %c0_25] : memref<8x32xf32, #tpu.memory_space<vmem>>, vector<8x32xf32>
    %cst_26 = arith.constant dense<0.000000e+00> : vector<8x256xf32>
    %50 = tpu.matmul %49, %48, %cst_26 {dimension_numbers = #tpu.dot_dimension_numbers<[1], [0], [0], [1], [0, 0, 1, 1], [], []>} : vector<8x32xf32>, vector<32x256xf32>, vector<8x256xf32> -> vector<8x256xf32>
    %c0_27 = arith.constant 0 : index
    %c0_28 = arith.constant 0 : index
    %51 = vector.load %arg7[%c0_27, %c0_28] : memref<8x1xf32, #tpu.memory_space<vmem>>, vector<8x1xf32>
    %52 = vector.broadcast %51 : vector<8x1xf32> to vector<8x256xf32>
    %53 = arith.addf %50, %52 : vector<8x256xf32>
    %c0_29 = arith.constant 0 : index
    %c0_30 = arith.constant 0 : index
    %54 = vector.load %arg8[%c0_29, %c0_30] : memref<8x256xf32, #tpu.memory_space<vmem>>, vector<8x256xf32>
    tpu.vector_store %arg8[%c0_29, %c0_30], %53 {strides = array<i32>} : memref<8x256xf32, #tpu.memory_space<vmem>>, vector<8x256xf32>,
    return
  }
  func.func @transform_0(%arg0: i32) -> (i32, i32) {
    %c0_i32 = arith.constant 0 : i32
    %c0_i32_0 = arith.constant 0 : i32
    return %c0_i32, %arg0 : i32, i32
  }
  func.func @transform_1(%arg0: i32) -> (i32, i32) {
    %c0_i32 = arith.constant 0 : i32
    %c0_i32_0 = arith.constant 0 : i32
    %c0_i32_1 = arith.constant 0 : i32
    return %c0_i32, %c0_i32_0 : i32, i32
  }
  func.func @transform_2(%arg0: i32) -> (i32, i32) {
    %c0_i32 = arith.constant 0 : i32
    %c0_i32_0 = arith.constant 0 : i32
    %c0_i32_1 = arith.constant 0 : i32
    return %c0_i32, %c0_i32_0 : i32, i32
  }
  func.func @transform_3(%arg0: i32) -> (i32, i32) {
    %c0_i32 = arith.constant 0 : i32
    %c0_i32_0 = arith.constant 0 : i32
    %c0_i32_1 = arith.constant 0 : i32
    return %c0_i32, %c0_i32_0 : i32, i32
  }
  func.func @transform_4(%arg0: i32) -> (i32, i32) {
    %c0_i32 = arith.constant 0 : i32
    %c0_i32_0 = arith.constant 0 : i32
    %c0_i32_1 = arith.constant 0 : i32
    return %c0_i32, %c0_i32_0 : i32, i32
  }
  func.func @transform_5(%arg0: i32) -> (i32, i32) {
    %c0_i32 = arith.constant 0 : i32
    %c0_i32_0 = arith.constant 0 : i32
    %c0_i32_1 = arith.constant 0 : i32
    return %c0_i32, %c0_i32_0 : i32, i32
  }
  func.func @transform_6(%arg0: i32) -> (i32, i32) {
    %c0_i32 = arith.constant 0 : i32
    %c0_i32_0 = arith.constant 0 : i32
    %c0_i32_1 = arith.constant 0 : i32
    return %c0_i32, %c0_i32_0 : i32, i32
  }
  func.func @transform_7(%arg0: i32) -> (i32, i32) {
    %c0_i32 = arith.constant 0 : i32
    %c0_i32_0 = arith.constant 0 : i32
    return %c0_i32, %arg0 : i32, i32
  }
}

</mosaic_0001>

<llo_original>
// kernel: tpu_custom_call.1
$region0: #{tpu_custom_call.1}
  #allocation0 [shape = 'u32[]', space=smem, size = 0x4, offset = 0x4, fixed_abs, tag = 'smem constant byte address 0x4 - core index']
  #allocation1 [shape = 'u32[144,128]{1,0:T(1,128)}', space=vmem, size = 0x12000, scoped, tag = 'internal scratch']
  %s0 = inlined_call_operand.vmem [shape: f32[16,256], index: 0, kind: input, shape index: {}]
  %s1 = inlined_call_operand.vmem [shape: f32[32,16], index: 1, kind: input, shape index: {}]
  %s2 = inlined_call_operand.vmem [shape: f32[32,1], index: 2, kind: input, shape index: {}]
  %s3 = inlined_call_operand.vmem [shape: f32[32,32], index: 3, kind: input, shape index: {}]
  %s4 = inlined_call_operand.vmem [shape: f32[32,1], index: 4, kind: input, shape index: {}]
  %s5 = inlined_call_operand.vmem [shape: f32[8,32], index: 5, kind: input, shape index: {}]
  %s6 = inlined_call_operand.vmem [shape: f32[8,1], index: 6, kind: input, shape index: {}]
  %s7 = inlined_call_operand.hbm [shape: f32[8,256], index: 7, kind: output, shape index: {}]
  %s8 = sld [smem:[#allocation0]]
  $region38: #{tpu_custom_call.1} parent=0
    _
  %s10 = ssub.s32 1, %s8
  %s11 = scalar_select 0, %s10, %s8
  $region1: #{tpu_custom_call.1} parent=0
    #allocation2 [shape = 'u8[8192]{0}', space=vmem, size = 0x2000, scoped, tag = 'output window, operand 0, single buffered']
    #allocation3 [shape = 's32[1]{0}', space=sflag, size = 0x4, scoped, tag = 'scoped memory for tpu_custom_call.1']
    %12 = vsyncpa [#allocation3], 0
    // Predicated region
    $region2: #{tpu_custom_call.1} parent=1 // pred_check
      _
    $region3: #{tpu_custom_call.1} parent=1 // pred_check_branch
      %14 = sbr.rel (0) target = $region5
    $region4: #{tpu_custom_call.1} parent=1 // pred_region
      _
    $region5: #{tpu_custom_call.1} parent=1 // pred_fallthru
      _
    // Predicated region
    $region6: #{tpu_custom_call.1} parent=1 // pred_check
      _
    $region7: #{tpu_custom_call.1} parent=1 // pred_check_branch
      %16 = sbr.rel (0) target = $region9
    $region8: #{tpu_custom_call.1} parent=1 // pred_region
      _
    $region9: #{tpu_custom_call.1} parent=1 // pred_fallthru
      _
    // Predicated region
    $region10: #{tpu_custom_call.1} parent=1 // pred_check
      _
    $region11: #{tpu_custom_call.1} parent=1 // pred_check_branch
      %18 = sbr.rel (0) target = $region13
    $region12: #{tpu_custom_call.1} parent=1 // pred_region
      _
    $region13: #{tpu_custom_call.1} parent=1 // pred_fallthru
      _
    // Predicated region
    $region14: #{tpu_custom_call.1} parent=1 // pred_check
      _
    $region15: #{tpu_custom_call.1} parent=1 // pred_check_branch
      %20 = sbr.rel (0) target = $region17
    $region16: #{tpu_custom_call.1} parent=1 // pred_region
      _
    $region17: #{tpu_custom_call.1} parent=1 // pred_fallthru
      _
    // Predicated region
    $region18: #{tpu_custom_call.1} parent=1 // pred_check
      _
    $region19: #{tpu_custom_call.1} parent=1 // pred_check_branch
      %22 = sbr.rel (0) target = $region21
    $region20: #{tpu_custom_call.1} parent=1 // pred_region
      _
    $region21: #{tpu_custom_call.1} parent=1 // pred_fallthru
      _
    // Predicated region
    $region22: #{tpu_custom_call.1} parent=1 // pred_check
      _
    $region23: #{tpu_custom_call.1} parent=1 // pred_check_branch
      %24 = sbr.rel (0) target = $region25
    $region24: #{tpu_custom_call.1} parent=1 // pred_region
      _
    $region25: #{tpu_custom_call.1} parent=1 // pred_fallthru
      _
    // Predicated region
    $region26: #{tpu_custom_call.1} parent=1 // pred_check
      _
    $region27: #{tpu_custom_call.1} parent=1 // pred_check_branch
      %26 = sbr.rel (0) target = $region29
    $region28: #{tpu_custom_call.1} parent=1 // pred_region
      _
    $region29: #{tpu_custom_call.1} parent=1 // pred_fallthru
      _
    %v27 = vld [vmem:[%s1] sm:$0xff]
    %v28 = vld [vmem:[%s1 + $0x8] sm:$0xff]
    %v29 = vld [vmem:[%s1 + $0x10] sm:$0xff]
    %v30 = vld [vmem:[%s1 + $0x18] sm:$0xff]
    %v31 = vld [vmem:[%s0] sm:$0xff]
    %v32 = vld [vmem:[%s0 + $0x8] sm:$0xff]
    %v33 = vld [vmem:[%s0 + $0x10] sm:$0xff]
    %v34 = vld [vmem:[%s0 + $0x18] sm:$0xff]
    %v35 = vld [vmem:[%s2] sm:$0xff]
    %v36 = vld [vmem:[%s2 + $0x8] sm:$0xff]
    %v37 = vld [vmem:[%s2 + $0x10] sm:$0xff]
    %v38 = vld [vmem:[%s2 + $0x18] sm:$0xff]
    %40 = vset.pattern.permute.xlu0 0
    %41 = vperm.xlu0 %40, %v35
    %v42 = vpop.permute.xlu0 %41
    %45 = vset.pattern.permute.xlu0 0
    %46 = vperm.xlu0 %45, %v36
    %v47 = vpop.permute.xlu0 %46
    %50 = vset.pattern.permute.xlu0 0
    %51 = vperm.xlu0 %50, %v37
    %v52 = vpop.permute.xlu0 %51
    %55 = vset.pattern.permute.xlu0 0
    %56 = vperm.xlu0 %55, %v38
    %v57 = vpop.permute.xlu0 %56
    %vm59 = vcmask 130048
    %v61 = vsel %vm59, %v27, 0
    %v64 = vsel %vm59, %v28, 0
    %v67 = vsel %vm59, %v29, 0
    %v70 = vsel %vm59, %v30, 0
    %72 = vmatprep.subr.mxu0 %v32
    %73 = vmatpush1.msra.mxu0 %v31
    %74 = vmatprep.subr.mxu0 %v34
    %75 = vmatpush1.msra.mxu0 %v33
    %76 = vmatprep.subr.mxu0 0.0
    %77 = vmatpush1.msra.mxu0 0.0
    %78 = vmatprep.subr.mxu0 0.0
    %79 = vmatpush1.msra.mxu0 0.0
    %80 = vmatprep.subr.mxu0 0.0
    %81 = vmatpush1.msra.mxu0 0.0
    %82 = vmatprep.subr.mxu0 0.0
    %83 = vmatpush1.msra.mxu0 0.0
    %84 = vmatprep.subr.mxu0 0.0
    %85 = vmatpush1.msra.mxu0 0.0
    %86 = vmatprep.subr.mxu0 0.0
    %87 = vmatpush1.msra.mxu0 0.0
    %88 = vmatprep.subr.mxu0 0.0
    %89 = vmatpush1.msra.mxu0 0.0
    %90 = vmatprep.subr.mxu0 0.0
    %91 = vmatpush1.msra.mxu0 0.0
    %92 = vmatprep.subr.mxu0 0.0
    %93 = vmatpush1.msra.mxu0 0.0
    %94 = vmatprep.subr.mxu0 0.0
    %95 = vmatpush1.msra.mxu0 0.0
    %96 = vmatprep.subr.mxu0 0.0
    %97 = vmatpush1.msra.mxu0 0.0
    %98 = vmatprep.subr.mxu0 0.0
    %99 = vmatpush1.msra.mxu0 0.0
    %100 = vmatprep.subr.mxu0 0.0
    %101 = vmatpush1.msra.mxu0 0.0
    %102 = vmatprep.subr.mxu0 0.0
    %103 = vmatpush1.msra.mxu0 0.0
    %104 = vmatprep.subr.mxu0 0.0
    %105 = vmatpush1.msra.mxu0 0.0
    %106 = vmatprep.subr.mxu0 0.0
    %107 = vmatpush1.msra.mxu0 0.0
    %108 = vmatprep.subr.mxu0 0.0
    %109 = vmatpush1.msra.mxu0 0.0
    %110 = vmatprep.subr.mxu0 0.0
    %111 = vmatpush1.msra.mxu0 0.0
    %112 = vmatprep.subr.mxu0 0.0
    %113 = vmatpush1.msra.mxu0 0.0
    %114 = vmatprep.subr.mxu0 0.0
    %115 = vmatpush1.msra.mxu0 0.0
    %116 = vmatprep.subr.mxu0 0.0
    %117 = vmatpush1.msra.mxu0 0.0
    %118 = vmatprep.subr.mxu0 0.0
    %119 = vmatpush1.msra.mxu0 0.0
    %120 = vmatprep.subr.mxu0 0.0
    %121 = vmatpush1.msra.mxu0 0.0
    %122 = vmatprep.subr.mxu0 0.0
    %123 = vmatpush1.msra.mxu0 0.0
    %124 = vmatprep.subr.mxu0 0.0
    %125 = vmatpush1.msra.mxu0 0.0
    %126 = vmatprep.subr.mxu0 0.0
    %127 = vmatpush1.msra.mxu0 0.0
    %128 = vmatprep.subr.mxu0 0.0
    %129 = vmatpush1.msra.mxu0 0.0
    %130 = vmatprep.subr.mxu0 0.0
    %131 = vmatpush1.msra.mxu0 0.0
    %132 = vmatprep.subr.mxu0 0.0
    %133 = vmatpush1.msra.mxu0 0.0
    %134 = vmatprep.subr.mxu0 0.0
    %135 = vmatpush1.msra.mxu0 0.0
    %136 = vmatprep.mubr.f32.mxu0 0.0
    %137 = vmatmul.mubr.f32.gmra.mrb[0].mxu0 %v61
    %v138 = vpop.f32.mrb[0].mxu0
    %v139 = vadd.f32 %v42, %v138
    %v140 = vpop.f32.mrb[0].mxu0
    %v141 = vadd.f32 %v42, %v140
    %142 = vmatprep.mubr.f32.mxu0 0.0
    %143 = vmatmul.mubr.f32.gmra.mrb[0].mxu0 %v64
    %v144 = vpop.f32.mrb[0].mxu0
    %v145 = vadd.f32 %v47, %v144
    %v146 = vpop.f32.mrb[0].mxu0
    %v147 = vadd.f32 %v47, %v146
    %148 = vmatprep.mubr.f32.mxu0 0.0
    %149 = vmatmul.mubr.f32.gmra.mrb[0].mxu0 %v67
    %v150 = vpop.f32.mrb[0].mxu0
    %v151 = vadd.f32 %v52, %v150
    %v152 = vpop.f32.mrb[0].mxu0
    %v153 = vadd.f32 %v52, %v152
    %154 = vmatprep.mubr.f32.mxu0 0.0
    %155 = vmatmul.mubr.f32.gmra.mrb[0].mxu0 %v70
    %v156 = vpop.f32.mrb[0].mxu0
    %v157 = vadd.f32 %v57, %v156
    %v158 = vpop.f32.mrb[0].mxu0
    %v159 = vadd.f32 %v57, %v158
    %160 = vdwg.mxu0
    %v161 = vmin.f32 %v139, 20.0
    %v162 = vmin.f32 %v141, 20.0
    %v163 = vmin.f32 %v145, 20.0
    %v164 = vmin.f32 %v147, 20.0
    %v165 = vmin.f32 %v151, 20.0
    %v166 = vmin.f32 %v153, 20.0
    %v167 = vmin.f32 %v157, 20.0
    %v168 = vmin.f32 %v159, 20.0
    %v169 = vmul.f32 %v161, 1.442695
    %v170 = vpow.pop %v169
    %v171 = vmul.f32 %v162, 1.442695
    %v172 = vpow.pop %v171
    %v173 = vmul.f32 %v163, 1.442695
    %v174 = vpow.pop %v173
    %v175 = vmul.f32 %v164, 1.442695
    %v176 = vpow.pop %v175
    %v177 = vmul.f32 %v165, 1.442695
    %v178 = vpow.pop %v177
    %v179 = vmul.f32 %v166, 1.442695
    %v180 = vpow.pop %v179
    %v181 = vmul.f32 %v167, 1.442695
    %v182 = vpow.pop %v181
    %v183 = vmul.f32 %v168, 1.442695
    %v184 = vpow.pop %v183
    %v185 = vadd.f32 %v170, 1.0
    %v186 = vadd.f32 %v172, 1.0
    %v187 = vadd.f32 %v174, 1.0
    %v188 = vadd.f32 %v176, 1.0
    %v189 = vadd.f32 %v178, 1.0
    %v190 = vadd.f32 %v180, 1.0
    %v191 = vadd.f32 %v182, 1.0
    %v192 = vadd.f32 %v184, 1.0
    %v193 = vmul.f32 %v185, %v185
    %v194 = vmul.f32 %v186, %v186
    %v195 = vmul.f32 %v187, %v187
    %v196 = vmul.f32 %v188, %v188
    %v197 = vmul.f32 %v189, %v189
    %v198 = vmul.f32 %v190, %v190
    %v199 = vmul.f32 %v191, %v191
    %v200 = vmul.f32 %v192, %v192
    %v201 = vsub.f32 %v193, 1.0
    %v202 = vsub.f32 %v194, 1.0
    %v203 = vsub.f32 %v195, 1.0
    %v204 = vsub.f32 %v196, 1.0
    %v205 = vsub.f32 %v197, 1.0
    %v206 = vsub.f32 %v198, 1.0
    %v207 = vsub.f32 %v199, 1.0
    %v208 = vsub.f32 %v200, 1.0
    %v209 = vmul.f32 %v139, %v201
    %v210 = vmul.f32 %v141, %v202
    %v211 = vmul.f32 %v145, %v203
    %v212 = vmul.f32 %v147, %v204
    %v213 = vmul.f32 %v151, %v205
    %v214 = vmul.f32 %v153, %v206
    %v215 = vmul.f32 %v157, %v207
    %v216 = vmul.f32 %v159, %v208
    %v217 = vadd.f32 %v193, 1.0
    %v218 = vadd.f32 %v194, 1.0
    %v219 = vadd.f32 %v195, 1.0
    %v220 = vadd.f32 %v196, 1.0
    %v221 = vadd.f32 %v197, 1.0
    %v222 = vadd.f32 %v198, 1.0
    %v223 = vadd.f32 %v199, 1.0
    %v224 = vadd.f32 %v200, 1.0
    %v225 = vrcp.pop %v217
    %v226 = vmul.f32 %v209, %v225
    %v227 = vrcp.pop %v218
    %v228 = vmul.f32 %v210, %v227
    %v229 = vrcp.pop %v219
    %v230 = vmul.f32 %v211, %v229
    %v231 = vrcp.pop %v220
    %v232 = vmul.f32 %v212, %v231
    %v233 = vrcp.pop %v221
    %v234 = vmul.f32 %v213, %v233
    %v235 = vrcp.pop %v222
    %v236 = vmul.f32 %v214, %v235
    %v237 = vrcp.pop %v223
    %v238 = vmul.f32 %v215, %v237
    %v239 = vrcp.pop %v224
    %v240 = vmul.f32 %v216, %v239
    %v241 = vld [vmem:[%s3] sm:$0xff]
    %v242 = vld [vmem:[%s3 + $0x8] sm:$0xff]
    %v243 = vld [vmem:[%s3 + $0x10] sm:$0xff]
    %v244 = vld [vmem:[%s3 + $0x18] sm:$0xff]
    %v245 = vld [vmem:[%s4] sm:$0xff]
    %v246 = vld [vmem:[%s4 + $0x8] sm:$0xff]
    %v247 = vld [vmem:[%s4 + $0x10] sm:$0xff]
    %v248 = vld [vmem:[%s4 + $0x18] sm:$0xff]
    %250 = vset.pattern.permute.xlu0 0
    %251 = vperm.xlu0 %250, %v245
    %v252 = vpop.permute.xlu0 %251
    %255 = vset.pattern.permute.xlu0 0
    %256 = vperm.xlu0 %255, %v246
    %v257 = vpop.permute.xlu0 %256
    %260 = vset.pattern.permute.xlu0 0
    %261 = vperm.xlu0 %260, %v247
    %v262 = vpop.permute.xlu0 %261
    %265 = vset.pattern.permute.xlu0 0
    %266 = vperm.xlu0 %265, %v248
    %v267 = vpop.permute.xlu0 %266
    %vm269 = vcmask 261120
    %v271 = vsel %vm269, %v241, 0
    %v274 = vsel %vm269, %v242, 0
    %v277 = vsel %vm269, %v243, 0
    %v280 = vsel %vm269, %v244, 0
    %282 = vmatprep.subr.mxu0 %v228
    %283 = vmatpush1.msra.mxu0 %v226
    %284 = vmatprep.subr.mxu0 %v232
    %285 = vmatpush1.msra.mxu0 %v230
    %286 = vmatprep.subr.mxu0 %v236
    %287 = vmatpush1.msra.mxu0 %v234
    %288 = vmatprep.subr.mxu0 %v240
    %289 = vmatpush1.msra.mxu0 %v238
    %290 = vmatprep.subr.mxu0 0.0
    %291 = vmatpush1.msra.mxu0 0.0
    %292 = vmatprep.subr.mxu0 0.0
    %293 = vmatpush1.msra.mxu0 0.0
    %294 = vmatprep.subr.mxu0 0.0
    %295 = vmatpush1.msra.mxu0 0.0
    %296 = vmatprep.subr.mxu0 0.0
    %297 = vmatpush1.msra.mxu0 0.0
    %298 = vmatprep.subr.mxu0 0.0
    %299 = vmatpush1.msra.mxu0 0.0
    %300 = vmatprep.subr.mxu0 0.0
    %301 = vmatpush1.msra.mxu0 0.0
    %302 = vmatprep.subr.mxu0 0.0
    %303 = vmatpush1.msra.mxu0 0.0
    %304 = vmatprep.subr.mxu0 0.0
    %305 = vmatpush1.msra.mxu0 0.0
    %306 = vmatprep.subr.mxu0 0.0
    %307 = vmatpush1.msra.mxu0 0.0
    %308 = vmatprep.subr.mxu0 0.0
    %309 = vmatpush1.msra.mxu0 0.0
    %310 = vmatprep.subr.mxu0 0.0
    %311 = vmatpush1.msra.mxu0 0.0
    %312 = vmatprep.subr.mxu0 0.0
    %313 = vmatpush1.msra.mxu0 0.0
    %314 = vmatprep.subr.mxu0 0.0
    %315 = vmatpush1.msra.mxu0 0.0
    %316 = vmatprep.subr.mxu0 0.0
    %317 = vmatpush1.msra.mxu0 0.0
    %318 = vmatprep.subr.mxu0 0.0
    %319 = vmatpush1.msra.mxu0 0.0
    %320 = vmatprep.subr.mxu0 0.0
    %321 = vmatpush1.msra.mxu0 0.0
    %322 = vmatprep.subr.mxu0 0.0
    %323 = vmatpush1.msra.mxu0 0.0
    %324 = vmatprep.subr.mxu0 0.0
    %325 = vmatpush1.msra.mxu0 0.0
    %326 = vmatprep.subr.mxu0 0.0
    %327 = vmatpush1.msra.mxu0 0.0
    %328 = vmatprep.subr.mxu0 0.0
    %329 = vmatpush1.msra.mxu0 0.0
    %330 = vmatprep.subr.mxu0 0.0
    %331 = vmatpush1.msra.mxu0 0.0
    %332 = vmatprep.subr.mxu0 0.0
    %333 = vmatpush1.msra.mxu0 0.0
    %334 = vmatprep.subr.mxu0 0.0
    %335 = vmatpush1.msra.mxu0 0.0
    %336 = vmatprep.subr.mxu0 0.0
    %337 = vmatpush1.msra.mxu0 0.0
    %338 = vmatprep.subr.mxu0 0.0
    %339 = vmatpush1.msra.mxu0 0.0
    %340 = vmatprep.subr.mxu0 0.0
    %341 = vmatpush1.msra.mxu0 0.0
    %342 = vmatprep.subr.mxu0 0.0
    %343 = vmatpush1.msra.mxu0 0.0
    %344 = vmatprep.subr.mxu0 0.0
    %345 = vmatpush1.msra.mxu0 0.0
    %346 = vmatprep.mubr.f32.mxu0 0.0
    %347 = vmatmul.mubr.f32.gmra.mrb[0].mxu0 %v271
    %v348 = vpop.f32.mrb[0].mxu0
    %v349 = vadd.f32 %v252, %v348
    %v350 = vpop.f32.mrb[0].mxu0
    %v351 = vadd.f32 %v252, %v350
    %352 = vmatprep.mubr.f32.mxu0 0.0
    %353 = vmatmul.mubr.f32.gmra.mrb[0].mxu0 %v274
    %v354 = vpop.f32.mrb[0].mxu0
    %v355 = vadd.f32 %v257, %v354
    %v356 = vpop.f32.mrb[0].mxu0
    %v357 = vadd.f32 %v257, %v356
    %358 = vmatprep.mubr.f32.mxu0 0.0
    %359 = vmatmul.mubr.f32.gmra.mrb[0].mxu0 %v277
    %v360 = vpop.f32.mrb[0].mxu0
    %v361 = vadd.f32 %v262, %v360
    %v362 = vpop.f32.mrb[0].mxu0
    %v363 = vadd.f32 %v262, %v362
    %364 = vmatprep.mubr.f32.mxu0 0.0
    %365 = vmatmul.mubr.f32.gmra.mrb[0].mxu0 %v280
    %v366 = vpop.f32.mrb[0].mxu0
    %v367 = vadd.f32 %v267, %v366
    %v368 = vpop.f32.mrb[0].mxu0
    %v369 = vadd.f32 %v267, %v368
    %370 = vdwg.mxu0
    %v371 = vmin.f32 %v349, 20.0
    %v372 = vmin.f32 %v351, 20.0
    %v373 = vmin.f32 %v355, 20.0
    %v374 = vmin.f32 %v357, 20.0
    %v375 = vmin.f32 %v361, 20.0
    %v376 = vmin.f32 %v363, 20.0
    %v377 = vmin.f32 %v367, 20.0
    %v378 = vmin.f32 %v369, 20.0
    %v379 = vmul.f32 %v371, 1.442695
    %v380 = vpow.pop %v379
    %v381 = vmul.f32 %v372, 1.442695
    %v382 = vpow.pop %v381
    %v383 = vmul.f32 %v373, 1.442695
    %v384 = vpow.pop %v383
    %v385 = vmul.f32 %v374, 1.442695
    %v386 = vpow.pop %v385
    %v387 = vmul.f32 %v375, 1.442695
    %v388 = vpow.pop %v387
    %v389 = vmul.f32 %v376, 1.442695
    %v390 = vpow.pop %v389
    %v391 = vmul.f32 %v377, 1.442695
    %v392 = vpow.pop %v391
    %v393 = vmul.f32 %v378, 1.442695
    %v394 = vpow.pop %v393
    %v395 = vadd.f32 %v380, 1.0
    %v396 = vadd.f32 %v382, 1.0
    %v397 = vadd.f32 %v384, 1.0
    %v398 = vadd.f32 %v386, 1.0
    %v399 = vadd.f32 %v388, 1.0
    %v400 = vadd.f32 %v390, 1.0
    %v401 = vadd.f32 %v392, 1.0
    %v402 = vadd.f32 %v394, 1.0
    %v403 = vmul.f32 %v395, %v395
    %v404 = vmul.f32 %v396, %v396
    %v405 = vmul.f32 %v397, %v397
    %v406 = vmul.f32 %v398, %v398
    %v407 = vmul.f32 %v399, %v399
    %v408 = vmul.f32 %v400, %v400
    %v409 = vmul.f32 %v401, %v401
    %v410 = vmul.f32 %v402, %v402
    %v411 = vsub.f32 %v403, 1.0
    %v412 = vsub.f32 %v404, 1.0
    %v413 = vsub.f32 %v405, 1.0
    %v414 = vsub.f32 %v406, 1.0
    %v415 = vsub.f32 %v407, 1.0
    %v416 = vsub.f32 %v408, 1.0
    %v417 = vsub.f32 %v409, 1.0
    %v418 = vsub.f32 %v410, 1.0
    %v419 = vmul.f32 %v349, %v411
    %v420 = vmul.f32 %v351, %v412
    %v421 = vmul.f32 %v355, %v413
    %v422 = vmul.f32 %v357, %v414
    %v423 = vmul.f32 %v361, %v415
    %v424 = vmul.f32 %v363, %v416
    %v425 = vmul.f32 %v367, %v417
    %v426 = vmul.f32 %v369, %v418
    %v427 = vadd.f32 %v403, 1.0
    %v428 = vadd.f32 %v404, 1.0
    %v429 = vadd.f32 %v405, 1.0
    %v430 = vadd.f32 %v406, 1.0
    %v431 = vadd.f32 %v407, 1.0
    %v432 = vadd.f32 %v408, 1.0
    %v433 = vadd.f32 %v409, 1.0
    %v434 = vadd.f32 %v410, 1.0
    %v435 = vrcp.pop %v427
    %v436 = vmul.f32 %v419, %v435
    %v437 = vrcp.pop %v428
    %v438 = vmul.f32 %v420, %v437
    %v439 = vrcp.pop %v429
    %v440 = vmul.f32 %v421, %v439
    %v441 = vrcp.pop %v430
    %v442 = vmul.f32 %v422, %v441
    %v443 = vrcp.pop %v431
    %v444 = vmul.f32 %v423, %v443
    %v445 = vrcp.pop %v432
    %v446 = vmul.f32 %v424, %v445
    %v447 = vrcp.pop %v433
    %v448 = vmul.f32 %v425, %v447
    %v449 = vrcp.pop %v434
    %v450 = vmul.f32 %v426, %v449
    %v451 = vadd.f32 %v436, 0.0
    %v452 = vadd.f32 %v438, 0.0
    %v453 = vadd.f32 %v440, 0.0
    %v454 = vadd.f32 %v442, 0.0
    %v455 = vadd.f32 %v444, 0.0
    %v456 = vadd.f32 %v446, 0.0
    %v457 = vadd.f32 %v448, 0.0
    %v458 = vadd.f32 %v450, 0.0
    %v459 = vtanh.pop %v451
    %v460 = vtanh.pop %v452
    %v461 = vtanh.pop %v453
    %v462 = vtanh.pop %v454
    %v463 = vtanh.pop %v455
    %v464 = vtanh.pop %v456
    %v465 = vtanh.pop %v457
    %v466 = vtanh.pop %v458
    %v467 = vmul.f32 %v459, 1.998
    %v468 = vmul.f32 %v460, 1.998
    %v469 = vmul.f32 %v461, 1.998
    %v470 = vmul.f32 %v462, 1.998
    %v471 = vmul.f32 %v463, 1.998
    %v472 = vmul.f32 %v464, 1.998
    %v473 = vmul.f32 %v465, 1.998
    %v474 = vmul.f32 %v466, 1.998
    %v475 = vround.ne.pseudo %v467
    %v476 = vround.ne.pseudo %v468
    %v477 = vround.ne.pseudo %v469
    %v478 = vround.ne.pseudo %v470
    %v479 = vround.ne.pseudo %v471
    %v480 = vround.ne.pseudo %v472
    %v481 = vround.ne.pseudo %v473
    %v482 = vround.ne.pseudo %v474
    %v483 = vmul.f32 %v475, 0.5
    %v484 = vmul.f32 %v476, 0.5
    %v485 = vmul.f32 %v477, 0.5
    %v486 = vmul.f32 %v478, 0.5
    %v487 = vmul.f32 %v479, 0.5
    %v488 = vmul.f32 %v480, 0.5
    %v489 = vmul.f32 %v481, 0.5
    %v490 = vmul.f32 %v482, 0.5
    %v491 = vld [vmem:[%s5] sm:$0xff]
    %v492 = vld [vmem:[%s6] sm:$0xff]
    %494 = vset.pattern.permute.xlu0 0
    %495 = vperm.xlu0 %494, %v492
    %v496 = vpop.permute.xlu0 %495
    %v499 = vsel %vm269, %v491, 0
    %501 = vmatprep.subr.mxu0 %v484
    %502 = vmatpush1.msra.mxu0 %v483
    %503 = vmatprep.subr.mxu0 %v486
    %504 = vmatpush1.msra.mxu0 %v485
    %505 = vmatprep.subr.mxu0 %v488
    %506 = vmatpush1.msra.mxu0 %v487
    %507 = vmatprep.subr.mxu0 %v490
    %508 = vmatpush1.msra.mxu0 %v489
    %509 = vmatprep.subr.mxu0 0.0
    %510 = vmatpush1.msra.mxu0 0.0
    %511 = vmatprep.subr.mxu0 0.0
    %512 = vmatpush1.msra.mxu0 0.0
    %513 = vmatprep.subr.mxu0 0.0
    %514 = vmatpush1.msra.mxu0 0.0
    %515 = vmatprep.subr.mxu0 0.0
    %516 = vmatpush1.msra.mxu0 0.0
    %517 = vmatprep.subr.mxu0 0.0
    %518 = vmatpush1.msra.mxu0 0.0
    %519 = vmatprep.subr.mxu0 0.0
    %520 = vmatpush1.msra.mxu0 0.0
    %521 = vmatprep.subr.mxu0 0.0
    %522 = vmatpush1.msra.mxu0 0.0
    %523 = vmatprep.subr.mxu0 0.0
    %524 = vmatpush1.msra.mxu0 0.0
    %525 = vmatprep.subr.mxu0 0.0
    %526 = vmatpush1.msra.mxu0 0.0
    %527 = vmatprep.subr.mxu0 0.0
    %528 = vmatpush1.msra.mxu0 0.0
    %529 = vmatprep.subr.mxu0 0.0
    %530 = vmatpush1.msra.mxu0 0.0
    %531 = vmatprep.subr.mxu0 0.0
    %532 = vmatpush1.msra.mxu0 0.0
    %533 = vmatprep.subr.mxu0 0.0
    %534 = vmatpush1.msra.mxu0 0.0
    %535 = vmatprep.subr.mxu0 0.0
    %536 = vmatpush1.msra.mxu0 0.0
    %537 = vmatprep.subr.mxu0 0.0
    %538 = vmatpush1.msra.mxu0 0.0
    %539 = vmatprep.subr.mxu0 0.0
    %540 = vmatpush1.msra.mxu0 0.0
    %541 = vmatprep.subr.mxu0 0.0
    %542 = vmatpush1.msra.mxu0 0.0
    %543 = vmatprep.subr.mxu0 0.0
    %544 = vmatpush1.msra.mxu0 0.0
    %545 = vmatprep.subr.mxu0 0.0
    %546 = vmatpush1.msra.mxu0 0.0
    %547 = vmatprep.subr.mxu0 0.0
    %548 = vmatpush1.msra.mxu0 0.0
    %549 = vmatprep.subr.mxu0 0.0
    %550 = vmatpush1.msra.mxu0 0.0
    %551 = vmatprep.subr.mxu0 0.0
    %552 = vmatpush1.msra.mxu0 0.0
    %553 = vmatprep.subr.mxu0 0.0
    %554 = vmatpush1.msra.mxu0 0.0
    %555 = vmatprep.subr.mxu0 0.0
    %556 = vmatpush1.msra.mxu0 0.0
    %557 = vmatprep.subr.mxu0 0.0
    %558 = vmatpush1.msra.mxu0 0.0
    %559 = vmatprep.subr.mxu0 0.0
    %560 = vmatpush1.msra.mxu0 0.0
    %561 = vmatprep.subr.mxu0 0.0
    %562 = vmatpush1.msra.mxu0 0.0
    %563 = vmatprep.subr.mxu0 0.0
    %564 = vmatpush1.msra.mxu0 0.0
    %565 = vmatprep.mubr.f32.mxu0 0.0
    %566 = vmatmul.mubr.f32.gmra.mrb[0].mxu0 %v499
    %v567 = vpop.f32.mrb[0].mxu0
    %v568 = vadd.f32 %v496, %v567
    %v569 = vpop.f32.mrb[0].mxu0
    %v570 = vadd.f32 %v496, %v569
    %571 = vdwg.mxu0
    %572 = vst [vmem:[#allocation2] sm:$0xff] %v568
    %573 = vst [vmem:[#allocation2 + $0x8] sm:$0xff] %v570
    // Predicated region
    $region30: #{tpu_custom_call.1} parent=1 // pred_check
      _
    $region31: #{tpu_custom_call.1} parent=1 // pred_check_branch
      %575 = sbr.rel (0) target = $region33
    $region32: #{tpu_custom_call.1} parent=1 // pred_region
      %s577 = ssub.s32 256, 256
      %578 = vsyncadd [#allocation3], %s577
      %s580 = sshll.u32 [#allocation2], 4
      %s581 = int_to_ptr.vmem [resolvable:$true] %s580
      %583 = dma.vmem_to_hbm [thread:$0]  %s581, 256, %s7, [#allocation3]
    $region33: #{tpu_custom_call.1} parent=1 // pred_fallthru
      _
    // Predicated region
    $region34: #{tpu_custom_call.1} parent=1 // pred_check
      _
    $region35: #{tpu_custom_call.1} parent=1 // pred_check_branch
      %585 = sbr.rel (0) target = $region37
    $region36: #{tpu_custom_call.1} parent=1 // pred_region
      %586 = dma.done [#allocation3], 256
    $region37: #{tpu_custom_call.1} parent=1 // pred_fallthru
      _
    %587 = vsyncpa [#allocation3], 1

</llo_original>
